<compile_context>
chip_gen: v7x
topology: tpu7x:2x2x1
jax: 0.10.0
libtpu: 0.0.40
codegen_flags: <defaults>
</compile_context>

<pallas_src>
import jax
import jax.numpy as jnp
from jax.experimental import pallas as pl
from jax.experimental.pallas import tpu as pltpu


def _biasfree_ln_kernel(x_ref, w_ref, o_ref):
    # x_ref : (tile_rows, C) block in VMEM
    # w_ref : (1, C) weight, resident (constant index_map), broadcast over rows
    x = x_ref[...].astype(jnp.float32)
    c = x.shape[-1]
    inv_c = jnp.float32(1.0 / c)

    # Single-pass biased variance: var = E[x^2] - E[x]^2  (torch unbiased=False)
    s1 = jnp.sum(x, axis=-1, keepdims=True)
    s2 = jnp.sum(x * x, axis=-1, keepdims=True)
    mean = s1 * inv_c
    var = jnp.maximum(s2 * inv_c - mean * mean, 0.0)

    inv = jax.lax.rsqrt(var + 1e-5)                      # EUP rsqrt
    w = w_ref[...].astype(jnp.float32)                   # (1, C)
    o_ref[...] = (x * (inv * w)).astype(o_ref.dtype)


def biasfree_layernorm(x, weight, *, tile_rows=None, target_block_bytes=2 << 20):
    """x: (..., C); weight: (C,). Returns x / sqrt(var(x, -1) + 1e-5) * weight."""
    orig_shape = x.shape
    C = orig_shape[-1]
    assert weight.shape == (C,)

    x2d = x.reshape(-1, C)
    N = x2d.shape[0]
    itemsize = jnp.dtype(x2d.dtype).itemsize

    if tile_rows is None:
        # Aim for ~target_block_bytes per input block (mem-bound sweet spot),
        # keep rows a multiple of 32 (covers f32/bf16/int8 sublane packing),
        # and never larger than needed to cover all rows.
        tr = target_block_bytes // max(1, C * itemsize)
        tr = max(8, (tr // 32) * 32)
        tr = min(tr, 4096)
        tr = min(tr, max(8, ((N + 7) // 8) * 8))
        tile_rows = int(tr)
    assert tile_rows % 8 == 0, "tile_rows must be a multiple of 8 (sublane)"

    # TODO(synk): for Restormer's C=48/96 (< 128 lanes) a lane-dense relayout
    # (rows folded into lanes, reduction over sublanes) would avoid masked
    # vst.msk partial stores; kept simple/correct here.

    w2d = weight.reshape(1, C)
    grid = (pl.cdiv(N, tile_rows),)

    # VMEM budget: double-buffered input + output blocks + tiny weight block.
    block_bytes = tile_rows * C * itemsize
    vmem_bytes = 4 * block_bytes + 4 * C * 4 + (2 << 20)          # + headroom
    vmem_bytes = int(min(max(vmem_bytes, 16 << 20), 40 << 20))    # safe on v5e..v7x

    out = pl.pallas_call(
        _biasfree_ln_kernel,
        out_shape=jax.ShapeDtypeStruct((N, C), x.dtype),
        grid_spec=pltpu.PrefetchScalarGridSpec(
            num_scalar_prefetch=0,
            grid=grid,
            in_specs=[
                pl.BlockSpec((tile_rows, C), lambda i: (i, 0)),
                pl.BlockSpec((1, C), lambda i: (0, 0)),   # weight: resident
            ],
            out_specs=pl.BlockSpec((tile_rows, C), lambda i: (i, 0)),
        ),
        compiler_params=pltpu.CompilerParams(
            dimension_semantics=("parallel",),   # shards the row grid on v7x's 2 TCs
            vmem_limit_bytes=vmem_bytes,
        ),
    )(x2d, w2d)

    return out.reshape(orig_shape)


def _reference(x, weight):
    x32 = x.astype(jnp.float32)
    var = jnp.var(x32, axis=-1, keepdims=True)  # biased, like unbiased=False
    y = x32 / jnp.sqrt(var + 1e-5) * weight.astype(jnp.float32)
    return y.astype(x.dtype)


if __name__ == "__main__":
    key = jax.random.PRNGKey(0)

    # Case 1: small Restormer-like token tensor (batch, H*W tokens, channels).
    B, S, C = 2, 8, 32
    x = jax.random.normal(key, (B, S, C), dtype=jnp.float32)
    weight = jnp.ones((C,), dtype=jnp.float32)   # module init: ones(normalized_shape)

    y = jax.block_until_ready(biasfree_layernorm(x, weight))
    y_ref = _reference(x, weight)
    assert y.shape == x.shape
    assert jnp.allclose(y, y_ref, atol=1e-5, rtol=1e-5), "case 1 mismatch"

    # Case 2: ragged row count (15 rows) + forced small tile to exercise the
    # pl.cdiv grid with a masked partial last block; non-trivial weights.
    k1, k2 = jax.random.split(key)
    B2, S2, C2 = 3, 5, 48
    x2 = jax.random.normal(k1, (B2, S2, C2), dtype=jnp.float32) * 2.0 + 0.5
    w2 = 1.0 + 0.1 * jax.random.normal(k2, (C2,), dtype=jnp.float32)

    y2 = jax.block_until_ready(biasfree_layernorm(x2, w2, tile_rows=8))
    y2_ref = _reference(x2, w2)
    assert y2.shape == x2.shape
    assert jnp.allclose(y2, y2_ref, atol=1e-5, rtol=1e-5), "case 2 mismatch"

    print("KERNEL_OK")
</pallas_src>

<mosaic_0001>
module attributes {stable_mosaic.version = 11 : i64} {
  func.func @_biasfree_ln_kernel(%arg0: i32, %arg1: memref<16x32xf32, #tpu.memory_space<vmem>>, %arg2: memref<1x32xf32, #tpu.memory_space<vmem>>, %arg3: memref<16x32xf32, #tpu.memory_space<vmem>>) attributes {dimension_semantics = [#tpu.dimension_semantics<parallel>], iteration_bounds = array<i64: 1>, scalar_prefetch = 0 : i64, scratch_operands = 0 : i64, tpu.core_type = #tpu.core_type<tc>, window_params = [{transform_indices = @transform_0, window_bounds = array<i64: 16, 32>}, {pipeline_mode = #tpu.pipeline_mode<synchronous>, transform_indices = @transform_1, window_bounds = array<i64: 1, 32>}, {transform_indices = @transform_2, window_bounds = array<i64: 16, 32>}]} {
    %c0 = arith.constant 0 : index
    %c0_0 = arith.constant 0 : index
    %0 = vector.load %arg1[%c0, %c0_0] : memref<16x32xf32, #tpu.memory_space<vmem>>, vector<16x32xf32>
    %cst = arith.constant dense<0.000000e+00> : vector<16xf32>
    %1 = vector.multi_reduction <add>, %0, %cst [1] : vector<16x32xf32> to vector<16xf32>
    %2 = vector.shape_cast %1 : vector<16xf32> to vector<16x1xf32>
    %3 = arith.mulf %0, %0 : vector<16x32xf32>
    %cst_1 = arith.constant dense<0.000000e+00> : vector<16xf32>
    %4 = vector.multi_reduction <add>, %3, %cst_1 [1] : vector<16x32xf32> to vector<16xf32>
    %5 = vector.shape_cast %4 : vector<16xf32> to vector<16x1xf32>
    %cst_2 = arith.constant 3.125000e-02 : f32
    %6 = vector.broadcast %cst_2 : f32 to vector<16x1xf32>
    %7 = arith.mulf %2, %6 : vector<16x1xf32>
    %cst_3 = arith.constant 3.125000e-02 : f32
    %8 = vector.broadcast %cst_3 : f32 to vector<16x1xf32>
    %9 = arith.mulf %5, %8 : vector<16x1xf32>
    %10 = arith.mulf %7, %7 : vector<16x1xf32>
    %11 = arith.subf %9, %10 : vector<16x1xf32>
    %cst_4 = arith.constant 0.000000e+00 : f32
    %12 = vector.broadcast %cst_4 : f32 to vector<16x1xf32>
    %13 = arith.maximumf %11, %12 : vector<16x1xf32>
    %cst_5 = arith.constant 9.99999974E-6 : f32
    %14 = vector.broadcast %cst_5 : f32 to vector<16x1xf32>
    %15 = arith.addf %13, %14 : vector<16x1xf32>
    %16 = math.rsqrt %15 : vector<16x1xf32>
    %c0_6 = arith.constant 0 : index
    %c0_7 = arith.constant 0 : index
    %17 = vector.load %arg2[%c0_6, %c0_7] : memref<1x32xf32, #tpu.memory_space<vmem>>, vector<1x32xf32>
    %18 = vector.broadcast %16 : vector<16x1xf32> to vector<16x32xf32>
    %19 = vector.broadcast %17 : vector<1x32xf32> to vector<16x32xf32>
    %20 = arith.mulf %18, %19 : vector<16x32xf32>
    %21 = arith.mulf %0, %20 : vector<16x32xf32>
    %c0_8 = arith.constant 0 : index
    %c0_9 = arith.constant 0 : index
    %22 = vector.load %arg3[%c0_8, %c0_9] : memref<16x32xf32, #tpu.memory_space<vmem>>, vector<16x32xf32>
    tpu.vector_store %arg3[%c0_8, %c0_9], %21 {strides = array<i32>} : memref<16x32xf32, #tpu.memory_space<vmem>>, vector<16x32xf32>,
    return
  }
  func.func @transform_0(%arg0: i32) -> (i32, i32) {
    %c0_i32 = arith.constant 0 : i32
    %c0_i32_0 = arith.constant 0 : i32
    return %arg0, %c0_i32 : i32, i32
  }
  func.func @transform_1(%arg0: i32) -> (i32, i32) {
    %c0_i32 = arith.constant 0 : i32
    %c0_i32_0 = arith.constant 0 : i32
    %c0_i32_1 = arith.constant 0 : i32
    return %c0_i32, %c0_i32_0 : i32, i32
  }
  func.func @transform_2(%arg0: i32) -> (i32, i32) {
    %c0_i32 = arith.constant 0 : i32
    %c0_i32_0 = arith.constant 0 : i32
    return %arg0, %c0_i32 : i32, i32
  }
}

</mosaic_0001>

<llo_original>
// kernel: tpu_custom_call.1
$region0: #{tpu_custom_call.1}
  #allocation0 [shape = 'u32[]', space=smem, size = 0x4, offset = 0x4, fixed_abs, tag = 'smem constant byte address 0x4 - core index']
  #allocation1 [shape = 'u32[144,128]{1,0:T(1,128)}', space=vmem, size = 0x12000, scoped, tag = 'internal scratch']
  %s0 = inlined_call_operand.hbm [shape: f32[16,32], index: 0, kind: input, shape index: {}]
  %s1 = inlined_call_operand.vmem [shape: f32[1,32], index: 1, kind: input, shape index: {}]
  %s2 = inlined_call_operand.hbm [shape: f32[16,32], index: 2, kind: output, shape index: {}]
  %s3 = sld [smem:[#allocation0]]
  $region22: #{tpu_custom_call.1} parent=0
    _
  %s5 = ssub.s32 1, %s3
  %s6 = scalar_select 0, %s5, %s3
  $region1: #{tpu_custom_call.1} parent=0
    #allocation2 [shape = 'u8[8192]{0}', space=vmem, size = 0x2000, scoped, tag = 'input window, operand 0, single buffered']
    #allocation3 [shape = 's32[1]{0}', space=sflag, size = 0x4, scoped, tag = 'scoped memory for tpu_custom_call.1']
    #allocation4 [shape = 's32[1]{0}', space=sflag, size = 0x4, scoped, tag = 'scoped memory for tpu_custom_call.1']
    #allocation5 [shape = 'u8[8192]{0}', space=vmem, size = 0x2000, scoped, tag = 'output window, operand 0, single buffered']
    %7 = vsyncpa [#allocation3], 0
    %8 = vsyncpa [#allocation4], 0
    // Predicated region
    $region2: #{tpu_custom_call.1} parent=1 // pred_check
      _
    $region3: #{tpu_custom_call.1} parent=1 // pred_check_branch
      %10 = sbr.rel (0) target = $region5
    $region4: #{tpu_custom_call.1} parent=1 // pred_region
      %s12 = ssub.s32 256, 256
      %13 = vsyncadd [#allocation3], %s12
      %s14 = sshll.u32 [#allocation2], 4
      %s15 = int_to_ptr.vmem [resolvable:$true] %s14
      %20 = dma.hbm_to_vmem [thread:$0]  %s0, 256, %s15, [#allocation3], 128, 128, 8
    $region5: #{tpu_custom_call.1} parent=1 // pred_fallthru
      _
    // Predicated region
    $region6: #{tpu_custom_call.1} parent=1 // pred_check
      _
    $region7: #{tpu_custom_call.1} parent=1 // pred_check_branch
      %22 = sbr.rel (0) target = $region9
    $region8: #{tpu_custom_call.1} parent=1 // pred_region
      _
    $region9: #{tpu_custom_call.1} parent=1 // pred_fallthru
      _
    // Predicated region
    $region10: #{tpu_custom_call.1} parent=1 // pred_check
      _
    $region11: #{tpu_custom_call.1} parent=1 // pred_check_branch
      %24 = sbr.rel (0) target = $region13
    $region12: #{tpu_custom_call.1} parent=1 // pred_region
      %25 = dma.done [#allocation3], 256
    $region13: #{tpu_custom_call.1} parent=1 // pred_fallthru
      _
    %v26 = vld [vmem:[#allocation2] sm:$0xff]
    %v27 = vld [vmem:[#allocation2 + $0x8] sm:$0xff]
    %vm28 = vcmask 261120
    %v29 = vsel %vm28, %v26, 0.0
    %30 = vadd.xlane.f32.xlu0 %v29
    %v31 = vpop.xlane.xlu0 %30
    %v32 = vsel %vm28, %v27, 0.0
    %33 = vadd.xlane.f32.xlu0 %v32
    %v34 = vpop.xlane.xlu0 %33
    %v35 = vmul.f32 %v26, %v26
    %v36 = vmul.f32 %v27, %v27
    %v37 = vsel %vm28, %v35, 0.0
    %38 = vadd.xlane.f32.xlu0 %v37
    %v39 = vpop.xlane.xlu0 %38
    %v40 = vsel %vm28, %v36, 0.0
    %41 = vadd.xlane.f32.xlu0 %v40
    %v42 = vpop.xlane.xlu0 %41
    %v43 = vmul.f32 %v31, 0.03125
    %v44 = vmul.f32 %v34, 0.03125
    %v45 = vmul.f32 %v39, 0.03125
    %v46 = vmul.f32 %v42, 0.03125
    %v47 = vmul.f32 %v43, %v43
    %v48 = vmul.f32 %v44, %v44
    %v49 = vsub.f32 %v45, %v47
    %v50 = vsub.f32 %v46, %v48
    %v51 = vmax.f32 %v49, 0.0
    %v52 = vmax.f32 %v50, 0.0
    %v53 = vadd.f32 %v51, 1e-05
    %v54 = vadd.f32 %v52, 1e-05
    %v55 = vrsqrt.pop %v53
    %v56 = vrsqrt.pop %v54
    %v57 = vld [vmem:[%s1] sm:$0x1]
    %v59 = vlaneseq
    %v60 = vshrl.u32 %v59, 7
    %v61 = vsub.s32 0, %v60
    %v62 = vrot.slane %v57, %v61
    %v64 = vmul.f32 %v55, %v62
    %v65 = vmul.f32 %v56, %v62
    %v66 = vmul.f32 %v26, %v64
    %v67 = vmul.f32 %v27, %v65
    %68 = vst.msk [vmem:[#allocation5] sm:$0xff] %vm28, %v66
    %69 = vst.msk [vmem:[#allocation5 + $0x8] sm:$0xff] %vm28, %v67
    // Predicated region
    $region14: #{tpu_custom_call.1} parent=1 // pred_check
      _
    $region15: #{tpu_custom_call.1} parent=1 // pred_check_branch
      %71 = sbr.rel (0) target = $region17
    $region16: #{tpu_custom_call.1} parent=1 // pred_region
      %s73 = ssub.s32 256, 256
      %74 = vsyncadd [#allocation4], %s73
      %s75 = sshll.u32 [#allocation5], 4
      %s76 = int_to_ptr.vmem [resolvable:$true] %s75
      %81 = dma.vmem_to_hbm [thread:$0]  %s76, 256, %s2, [#allocation4], 128, 128, 8
    $region17: #{tpu_custom_call.1} parent=1 // pred_fallthru
      _
    // Predicated region
    $region18: #{tpu_custom_call.1} parent=1 // pred_check
      _
    $region19: #{tpu_custom_call.1} parent=1 // pred_check_branch
      %83 = sbr.rel (0) target = $region21
    $region20: #{tpu_custom_call.1} parent=1 // pred_region
      %84 = dma.done [#allocation4], 256
    $region21: #{tpu_custom_call.1} parent=1 // pred_fallthru
      _
    %85 = vsyncpa [#allocation3], 1
    %86 = vsyncpa [#allocation4], 1

</llo_original>
